<compile_context>
chip_gen: v5e
topology: v5e:2x2
jax: 0.10.0
libtpu: 0.0.40
codegen_flags: <defaults>
</compile_context>

<pallas_src>
import functools
import math

import jax
import jax.numpy as jnp
from jax import lax
from jax.experimental import pallas as pl
from jax.experimental.pallas import tpu as pltpu

_SQRT_HALF = 1.0 / math.sqrt(2.0)


def _gelu_exact(x):
    # PyTorch nn.GELU() default: 0.5 * x * (1 + erf(x / sqrt(2)))
    return 0.5 * x * (1.0 + lax.erf(x * _SQRT_HALF))


def _round_up(x, m):
    return (x + m - 1) // m * m


def _cdiv(a, b):
    return (a + b - 1) // b


# --------------------------------------------------------------------------
# Kernel
# --------------------------------------------------------------------------
def ffn_kernel(x_ref, w1_ref, b1_ref, w2_ref, b2_ref, o_ref, acc_ref):
    # x_ref:  (tm, H_pad)      w1_ref: (H_pad, tf)   b1_ref: (1, tf)
    # w2_ref: (tf, H_pad)      b2_ref: (1, H_pad)
    # o_ref:  (tm, H_pad)      acc_ref: (tm, H_pad) f32 scratch
    f = pl.program_id(1)

    @pl.when(f == 0)
    def _():
        acc_ref[...] = jnp.zeros_like(acc_ref)

    # l1 partial: native-dtype operands straight into the MXU, f32 accumulate.
    h = jnp.dot(x_ref[...], w1_ref[...], preferred_element_type=jnp.float32)

    # dropout (eval mode) -> identity; bias-add + exact-erf GELU in f32.
    h = _gelu_exact(h + b1_ref[...].astype(jnp.float32))

    # l2 partial: accumulate this F-chunk's contribution (MXU, f32 acc).
    acc_ref[...] += jnp.dot(h.astype(w2_ref.dtype), w2_ref[...],
                            preferred_element_type=jnp.float32)

    @pl.when(f == pl.num_programs(1) - 1)
    def _():
        # Padded rows contain GELU(b1) garbage; they are sliced off host-side.
        o_ref[...] = (acc_ref[...]
                      + b2_ref[...].astype(jnp.float32)).astype(o_ref.dtype)


# --------------------------------------------------------------------------
# Tiling / VMEM-budget selection (generation-aware)
# --------------------------------------------------------------------------
def _vmem_budget_bytes():
    try:
        cap = int(pltpu.get_tpu_info().vmem_capacity_bytes)
    except Exception:
        cap = 64 * 1024 * 1024  # conservative fallback: v7x per-TC VMEM
    # ~48 MiB on v7x (64 MiB/TC), ~96 MiB on v5e/v6e (128 MiB).
    return (cap * 3) // 4


def _select_tiles(n_rows, h_pad, f_pad, *, x_bytes, out_bytes, w_bytes,
                  tile_rows, tile_f, budget):
    gran = 256                        # full MXU tiles on v6e/v7x, ok on v5e
    sublane = max(8, 32 // x_bytes)   # 8 f32 / 16 bf16 / 32 int8-fp8
    n_rows_r = _round_up(n_rows, sublane)

    def working_set(tm_, tf_):
        dbl = 2 * (tm_ * h_pad * (x_bytes + out_bytes)   # x + out tiles
                   + h_pad * tf_ * w_bytes               # W1 chunk
                   + tf_ * h_pad * w_bytes               # W2 chunk
                   + 8 * tf_ * w_bytes                   # b1 chunk (padded)
                   + 8 * h_pad * w_bytes)                # b2
        acc = tm_ * h_pad * 4                            # f32 accumulator
        h_tmp = tm_ * tf_ * (4 + w_bytes)                # f32 GELU temp + cast
        return dbl + acc + h_tmp

    tm = min(_round_up(tile_rows, sublane), n_rows_r)

    # Prefer fully VMEM-resident weights: a constant W1/W2 block index means
    # Pallas fetches them once and never re-streams them from HBM.
    tf = f_pad
    if working_set(tm, tf) > budget:
        tf = max(gran, (min(tile_f, f_pad) // gran) * gran)
        while tf > gran and (f_pad % tf != 0 or working_set(tm, tf) > budget):
            tf -= gran
        while working_set(tm, tf) > budget and tm > sublane:
            tm = max(sublane, _round_up(tm // 2, sublane))

    # v7x megacore: keep >= 2 row tiles on the "parallel" axis when the
    # problem is big enough to split without starving the MXU M dimension.
    # Free when weights are resident (no extra weight traffic per row tile).
    if tf == f_pad and _cdiv(n_rows_r, tm) < 2 and n_rows_r >= 512:
        tm = _round_up(_cdiv(n_rows_r, 2), sublane)

    return tm, tf


# --------------------------------------------------------------------------
# pallas_call wrapper
# --------------------------------------------------------------------------
@functools.partial(
    jax.jit,
    static_argnames=("tm", "tf", "h_pad", "f_pad", "out_dtype", "vmem_limit"))
def _ffn_pallas(xf, w1, b1, w2, b2, *, tm, tf, h_pad, f_pad, out_dtype,
                vmem_limit):
    n_rows, H = xf.shape
    F = w1.shape[1]
    n_pad = _round_up(n_rows, tm)

    # Zero padding is a no-op for the FFN math (padded columns/rows of the
    # weights are zero, so padded contributions are exactly zero).
    xf = jnp.pad(xf, ((0, n_pad - n_rows), (0, h_pad - H)))
    w1p = jnp.pad(w1, ((0, h_pad - H), (0, f_pad - F)))
    b1p = jnp.pad(b1.reshape(1, F), ((0, 0), (0, f_pad - F)))
    w2p = jnp.pad(w2, ((0, f_pad - F), (0, h_pad - H)))
    b2p = jnp.pad(b2.reshape(1, H), ((0, 0), (0, h_pad - H)))

    n_row_tiles = n_pad // tm
    n_f_tiles = f_pad // tf
    x_bytes = xf.dtype.itemsize
    w_bytes = w1p.dtype.itemsize
    out_bytes = jnp.dtype(out_dtype).itemsize
    # Weights are re-streamed once per row tile only when the F axis is tiled;
    # with resident weights (n_f_tiles == 1) they are fetched exactly once.
    weight_reads = n_row_tiles if n_f_tiles > 1 else 1
    cost = pl.CostEstimate(
        flops=int(4 * n_pad * h_pad * f_pad),            # two matmuls
        transcendentals=int(n_pad * f_pad),              # erf per intermediate
        bytes_accessed=int(n_pad * h_pad * x_bytes
                           + n_pad * h_pad * out_bytes
                           + weight_reads * 2 * h_pad * f_pad * w_bytes
                           + (f_pad + h_pad) * w_bytes),
    )

    out = pl.pallas_call(
        ffn_kernel,
        out_shape=jax.ShapeDtypeStruct((n_pad, h_pad), out_dtype),
        grid_spec=pltpu.PrefetchScalarGridSpec(
            num_scalar_prefetch=0,
            grid=(n_row_tiles, n_f_tiles),               # reduction axis last
            in_specs=[
                pl.BlockSpec((tm, h_pad), lambda i, f: (i, 0)),   # x rows
                pl.BlockSpec((h_pad, tf), lambda i, f: (0, f)),   # W1 chunk
                pl.BlockSpec((1, tf),     lambda i, f: (0, f)),   # b1 chunk
                pl.BlockSpec((tf, h_pad), lambda i, f: (f, 0)),   # W2 chunk
                pl.BlockSpec((1, h_pad),  lambda i, f: (0, 0)),   # b2 resident
            ],
            out_specs=pl.BlockSpec((tm, h_pad), lambda i, f: (i, 0)),
            scratch_shapes=[pltpu.VMEM((tm, h_pad), jnp.float32)],
        ),
        compiler_params=pltpu.CompilerParams(
            dimension_semantics=("parallel", "arbitrary"),
            vmem_limit_bytes=int(vmem_limit),
        ),
        cost_estimate=cost,
    )(xf, w1p, b1p, w2p, b2p)

    return out[:n_rows, :H]


def ffn_forward(x, w1, b1, w2, b2, *, tile_rows=1024, tile_f=2048,
                compute_dtype=None):
    """FFN forward: x[..., H] -> [..., H].

    w1: [H, F], b1: [F], w2: [F, H], b2: [H] (weights stored [in, out]).
    compute_dtype: optional MXU operand dtype for x/W1/W2 (e.g. jnp.bfloat16,
    recommended on all generations); accumulation stays f32 and the output
    keeps x's dtype.
    """
    lead = x.shape[:-1]
    H = x.shape[-1]
    F = w1.shape[1]
    n_rows = int(math.prod(lead)) if lead else 1
    out_dtype = jnp.dtype(x.dtype)

    xf = x.reshape(n_rows, H)
    if compute_dtype is not None:
        cd = jnp.dtype(compute_dtype)
        xf, w1, w2 = xf.astype(cd), w1.astype(cd), w2.astype(cd)

    # Feature dims padded to 256: lane-dense (multiple of 128) everywhere and
    # full 2x256x256 MXU tiles on v6e/v7x.
    h_pad = _round_up(H, 256)
    f_pad = _round_up(F, 256)

    budget = _vmem_budget_bytes()
    tm, tf = _select_tiles(
        n_rows, h_pad, f_pad,
        x_bytes=xf.dtype.itemsize, out_bytes=out_dtype.itemsize,
        w_bytes=w1.dtype.itemsize,
        tile_rows=tile_rows, tile_f=tile_f, budget=budget)

    out = _ffn_pallas(xf, w1, b1, w2, b2, tm=tm, tf=tf,
                      h_pad=h_pad, f_pad=f_pad, out_dtype=out_dtype,
                      vmem_limit=budget)
    return out.reshape(*lead, H)


# --------------------------------------------------------------------------
# Params / reference / demo
# --------------------------------------------------------------------------
def init_ffn_params(key, hidden_dim, ffn_multiplier, dtype=jnp.float32):
    """Deterministic init matching nn.Linear's U(-1/sqrt(fan_in), 1/sqrt(fan_in))."""
    F = hidden_dim * ffn_multiplier
    k1, k2, k3, k4 = jax.random.split(key, 4)
    bound1 = 1.0 / math.sqrt(hidden_dim)
    bound2 = 1.0 / math.sqrt(F)
    # Stored as [in, out] (transpose of torch's [out, in]) for row-major matmul.
    w1 = jax.random.uniform(k1, (hidden_dim, F), dtype, -bound1, bound1)
    b1 = jax.random.uniform(k2, (F,), dtype, -bound1, bound1)
    w2 = jax.random.uniform(k3, (F, hidden_dim), dtype, -bound2, bound2)
    b2 = jax.random.uniform(k4, (hidden_dim,), dtype, -bound2, bound2)
    return w1, b1, w2, b2


def ffn_reference(x, w1, b1, w2, b2):
    h = jnp.einsum("bsh,hf->bsf", x, w1) + b1
    h = _gelu_exact(h)
    return jnp.einsum("bsf,fh->bsh", h, w2) + b2


if __name__ == "__main__":
    hidden_dim = 32
    ffn_multiplier = 4
    batch, seq = 2, 8

    key = jax.random.PRNGKey(0)
    kx, kp = jax.random.split(key)
    x = jax.random.normal(kx, (batch, seq, hidden_dim), jnp.float32)
    w1, b1, w2, b2 = init_ffn_params(kp, hidden_dim, ffn_multiplier)

    ref = ffn_reference(x, w1, b1, w2, b2)

    # f32 path (exact comparison against the JAX reference).
    out = ffn_forward(x, w1, b1, w2, b2)
    out = jax.block_until_ready(out)
    assert out.shape == (batch, seq, hidden_dim)
    assert jnp.allclose(out, ref, atol=1e-5, rtol=1e-5), "mismatch vs JAX reference (f32)"

    # bf16 MXU-operand path (recommended for perf); looser tolerance.
    out_bf16 = ffn_forward(x, w1, b1, w2, b2, compute_dtype=jnp.bfloat16)
    out_bf16 = jax.block_until_ready(out_bf16)
    assert out_bf16.shape == (batch, seq, hidden_dim)
    assert jnp.allclose(out_bf16, ref, atol=5e-2, rtol=5e-2), "mismatch vs JAX reference (bf16)"

    print("KERNEL_OK")
</pallas_src>

<mosaic_0001>
module attributes {stable_mosaic.version = 11 : i64} {
  func.func @ffn_kernel(%arg0: i32, %arg1: i32, %arg2: memref<16x256xf32, #tpu.memory_space<vmem>>, %arg3: memref<256x256xf32, #tpu.memory_space<vmem>>, %arg4: memref<1x256xf32, #tpu.memory_space<vmem>>, %arg5: memref<256x256xf32, #tpu.memory_space<vmem>>, %arg6: memref<1x256xf32, #tpu.memory_space<vmem>>, %arg7: memref<16x256xf32, #tpu.memory_space<vmem>>, %arg8: memref<16x256xf32, #tpu.memory_space<vmem>>) attributes {dimension_semantics = [#tpu.dimension_semantics<parallel>, #tpu.dimension_semantics<arbitrary>], iteration_bounds = array<i64: 1, 1>, scalar_prefetch = 0 : i64, scratch_operands = 1 : i64, tpu.core_type = #tpu.core_type<tc>, window_params = [{transform_indices = @transform_0, window_bounds = array<i64: 16, 256>}, {transform_indices = @transform_1, window_bounds = array<i64: 256, 256>}, {transform_indices = @transform_2, window_bounds = array<i64: 1, 256>}, {transform_indices = @transform_3, window_bounds = array<i64: 256, 256>}, {pipeline_mode = #tpu.pipeline_mode<synchronous>, transform_indices = @transform_4, window_bounds = array<i64: 1, 256>}, {transform_indices = @transform_5, window_bounds = array<i64: 16, 256>}]} {
    %c0_i32 = arith.constant 0 : i32
    %0 = arith.cmpi eq, %arg1, %c0_i32 : i32
    %1 = arith.extui %0 : i1 to i32
    %c0_i32_0 = arith.constant 0 : i32
    %2 = arith.cmpi ne, %1, %c0_i32_0 : i32
    scf.if %2 {
      %cst_18 = arith.constant 0.000000e+00 : f32
      %25 = vector.broadcast %cst_18 : f32 to vector<16x256xf32>
      %c0_19 = arith.constant 0 : index
      %c0_20 = arith.constant 0 : index
      %26 = vector.load %arg8[%c0_19, %c0_20] : memref<16x256xf32, #tpu.memory_space<vmem>>, vector<16x256xf32>
      tpu.vector_store %arg8[%c0_19, %c0_20], %25 {strides = array<i32>} : memref<16x256xf32, #tpu.memory_space<vmem>>, vector<16x256xf32>,
    } else {
    }
    %c0 = arith.constant 0 : index
    %c0_1 = arith.constant 0 : index
    %3 = vector.load %arg2[%c0, %c0_1] : memref<16x256xf32, #tpu.memory_space<vmem>>, vector<16x256xf32>
    %c0_2 = arith.constant 0 : index
    %c0_3 = arith.constant 0 : index
    %4 = vector.load %arg3[%c0_2, %c0_3] : memref<256x256xf32, #tpu.memory_space<vmem>>, vector<256x256xf32>
    %cst = arith.constant dense<0.000000e+00> : vector<16x256xf32>
    %5 = tpu.matmul %3, %4, %cst {dimension_numbers = #tpu.dot_dimension_numbers<[1], [0], [0], [1], [0, 0, 1, 1], [], []>} : vector<16x256xf32>, vector<256x256xf32>, vector<16x256xf32> -> vector<16x256xf32>
    %c0_4 = arith.constant 0 : index
    %c0_5 = arith.constant 0 : index
    %6 = vector.load %arg4[%c0_4, %c0_5] : memref<1x256xf32, #tpu.memory_space<vmem>>, vector<1x256xf32>
    %7 = vector.broadcast %6 : vector<1x256xf32> to vector<16x256xf32>
    %8 = arith.addf %5, %7 : vector<16x256xf32>
    %cst_6 = arith.constant 5.000000e-01 : f32
    %9 = vector.broadcast %cst_6 : f32 to vector<16x256xf32>
    %10 = arith.mulf %9, %8 : vector<16x256xf32>
    %cst_7 = arith.constant 0.707106769 : f32
    %11 = vector.broadcast %cst_7 : f32 to vector<16x256xf32>
    %12 = arith.mulf %8, %11 : vector<16x256xf32>
    %13 = math.erf %12 : vector<16x256xf32>
    %cst_8 = arith.constant 1.000000e+00 : f32
    %14 = vector.broadcast %cst_8 : f32 to vector<16x256xf32>
    %15 = arith.addf %14, %13 : vector<16x256xf32>
    %16 = arith.mulf %10, %15 : vector<16x256xf32>
    %c0_9 = arith.constant 0 : index
    %c0_10 = arith.constant 0 : index
    %17 = vector.load %arg8[%c0_9, %c0_10] : memref<16x256xf32, #tpu.memory_space<vmem>>, vector<16x256xf32>
    %c0_11 = arith.constant 0 : index
    %c0_12 = arith.constant 0 : index
    %18 = vector.load %arg5[%c0_11, %c0_12] : memref<256x256xf32, #tpu.memory_space<vmem>>, vector<256x256xf32>
    %cst_13 = arith.constant dense<0.000000e+00> : vector<16x256xf32>
    %19 = tpu.matmul %16, %18, %cst_13 {dimension_numbers = #tpu.dot_dimension_numbers<[1], [0], [0], [1], [0, 0, 1, 1], [], []>} : vector<16x256xf32>, vector<256x256xf32>, vector<16x256xf32> -> vector<16x256xf32>
    %20 = arith.addf %17, %19 : vector<16x256xf32>
    %c0_14 = arith.constant 0 : index
    %c0_15 = arith.constant 0 : index
    %21 = vector.load %arg8[%c0_14, %c0_15] : memref<16x256xf32, #tpu.memory_space<vmem>>, vector<16x256xf32>
    tpu.vector_store %arg8[%c0_14, %c0_15], %20 {strides = array<i32>} : memref<16x256xf32, #tpu.memory_space<vmem>>, vector<16x256xf32>,
    %c0_i32_16 = arith.constant 0 : i32
    %22 = arith.cmpi eq, %arg1, %c0_i32_16 : i32
    %23 = arith.extui %22 : i1 to i32
    %c0_i32_17 = arith.constant 0 : i32
    %24 = arith.cmpi ne, %23, %c0_i32_17 : i32
    scf.if %24 {
      %c0_18 = arith.constant 0 : index
      %c0_19 = arith.constant 0 : index
      %25 = vector.load %arg8[%c0_18, %c0_19] : memref<16x256xf32, #tpu.memory_space<vmem>>, vector<16x256xf32>
      %c0_20 = arith.constant 0 : index
      %c0_21 = arith.constant 0 : index
      %26 = vector.load %arg6[%c0_20, %c0_21] : memref<1x256xf32, #tpu.memory_space<vmem>>, vector<1x256xf32>
      %27 = vector.broadcast %26 : vector<1x256xf32> to vector<16x256xf32>
      %28 = arith.addf %25, %27 : vector<16x256xf32>
      %c0_22 = arith.constant 0 : index
      %c0_23 = arith.constant 0 : index
      %29 = vector.load %arg7[%c0_22, %c0_23] : memref<16x256xf32, #tpu.memory_space<vmem>>, vector<16x256xf32>
      tpu.vector_store %arg7[%c0_22, %c0_23], %28 {strides = array<i32>} : memref<16x256xf32, #tpu.memory_space<vmem>>, vector<16x256xf32>,
    } else {
    }
    return
  }
  func.func @transform_0(%arg0: i32, %arg1: i32) -> (i32, i32) {
    %c0_i32 = arith.constant 0 : i32
    %c0_i32_0 = arith.constant 0 : i32
    return %arg0, %c0_i32 : i32, i32
  }
  func.func @transform_1(%arg0: i32, %arg1: i32) -> (i32, i32) {
    %c0_i32 = arith.constant 0 : i32
    %c0_i32_0 = arith.constant 0 : i32
    return %c0_i32, %arg1 : i32, i32
  }
  func.func @transform_2(%arg0: i32, %arg1: i32) -> (i32, i32) {
    %c0_i32 = arith.constant 0 : i32
    %c0_i32_0 = arith.constant 0 : i32
    return %c0_i32, %arg1 : i32, i32
  }
  func.func @transform_3(%arg0: i32, %arg1: i32) -> (i32, i32) {
    %c0_i32 = arith.constant 0 : i32
    %c0_i32_0 = arith.constant 0 : i32
    return %arg1, %c0_i32 : i32, i32
  }
  func.func @transform_4(%arg0: i32, %arg1: i32) -> (i32, i32) {
    %c0_i32 = arith.constant 0 : i32
    %c0_i32_0 = arith.constant 0 : i32
    %c0_i32_1 = arith.constant 0 : i32
    return %c0_i32, %c0_i32_0 : i32, i32
  }
  func.func @transform_5(%arg0: i32, %arg1: i32) -> (i32, i32) {
    %c0_i32 = arith.constant 0 : i32
    %c0_i32_0 = arith.constant 0 : i32
    return %arg0, %c0_i32 : i32, i32
  }
}

</mosaic_0001>

<llo_original>
// kernel: _ffn_pallas.1
$region0: #{_ffn_pallas.1}
  #allocation0 [shape = 'u32[]', space=smem, size = 0x4, offset = 0x4, fixed_abs, tag = 'smem constant byte address 0x4 - core index']
  #allocation1 [shape = 'u32[72,128]{1,0:T(1,128)}', space=vmem, size = 0x9000, scoped, tag = 'internal scratch']
  #allocation2 [shape = 'f32[16,256]{1,0:T(8,128)}', space=vmem, size = 0x4000, scoped, tag = 'scratch operand']
  %s0 = inlined_call_operand.vmem [shape: f32[16,256], index: 0, kind: input, shape index: {}]
  %s1 = inlined_call_operand.vmem [shape: f32[256,256], index: 1, kind: input, shape index: {}]
  %s2 = inlined_call_operand.vmem [shape: f32[1,256], index: 2, kind: input, shape index: {}]
  %s3 = inlined_call_operand.vmem [shape: f32[256,256], index: 3, kind: input, shape index: {}]
  %s4 = inlined_call_operand.vmem [shape: f32[1,256], index: 4, kind: input, shape index: {}]
  %s5 = inlined_call_operand.vmem [shape: f32[16,256], index: 5, kind: output, shape index: {}]
  %s6 = sld [smem:[#allocation0]]
  $region38: #{_ffn_pallas.1} parent=0
    _
  %s8 = ssub.s32 1, %s6
  %s9 = scalar_select 0, %s8, %s6
  // Predicated region
  $region2: #{_ffn_pallas.1} parent=0 // pred_check
    _
  $region3: #{_ffn_pallas.1} parent=0 // pred_check_branch
    %11 = sbr.rel (0) target = $region5
  $region4: #{_ffn_pallas.1} parent=0 // pred_region
    _
  $region5: #{_ffn_pallas.1} parent=0 // pred_fallthru
    _
  // Predicated region
  $region6: #{_ffn_pallas.1} parent=0 // pred_check
    _
  $region7: #{_ffn_pallas.1} parent=0 // pred_check_branch
    %13 = sbr.rel (0) target = $region9
  $region8: #{_ffn_pallas.1} parent=0 // pred_region
    _
  $region9: #{_ffn_pallas.1} parent=0 // pred_fallthru
    _
  // Predicated region
  $region10: #{_ffn_pallas.1} parent=0 // pred_check
    _
  $region11: #{_ffn_pallas.1} parent=0 // pred_check_branch
    %15 = sbr.rel (0) target = $region13
  $region12: #{_ffn_pallas.1} parent=0 // pred_region
    _
  $region13: #{_ffn_pallas.1} parent=0 // pred_fallthru
    _
  // Predicated region
  $region14: #{_ffn_pallas.1} parent=0 // pred_check
    _
  $region15: #{_ffn_pallas.1} parent=0 // pred_check_branch
    %17 = sbr.rel (0) target = $region17
  $region16: #{_ffn_pallas.1} parent=0 // pred_region
    _
  $region17: #{_ffn_pallas.1} parent=0 // pred_fallthru
    _
  // Predicated region
  $region18: #{_ffn_pallas.1} parent=0 // pred_check
    _
  $region19: #{_ffn_pallas.1} parent=0 // pred_check_branch
    %19 = sbr.rel (0) target = $region21
  $region20: #{_ffn_pallas.1} parent=0 // pred_region
    _
  $region21: #{_ffn_pallas.1} parent=0 // pred_fallthru
    _
  %p20 = scmp.eq.s32.totalorder 0, 0
  // Predicated region
  $region22: #{_ffn_pallas.1} parent=0 // pred_check
    %p21 = pneg %p20
  $region23: #{_ffn_pallas.1} parent=0 // pred_check_branch
    %23 = sbr.rel (%p21) target = $region25
  $region24: #{_ffn_pallas.1} parent=0 // pred_region
    %24 = vst [vmem:[#allocation2] sm:$0xff] 0.0
    %25 = vst [vmem:[#allocation2 + $0x8] sm:$0xff] 0.0
    %26 = vst [vmem:[#allocation2 + $0x10] sm:$0xff] 0.0
    %27 = vst [vmem:[#allocation2 + $0x18] sm:$0xff] 0.0
  $region25: #{_ffn_pallas.1} parent=0 // pred_fallthru
    _
  %v28 = vld [vmem:[%s0] sm:$0xff]
  %v29 = vld [vmem:[%s0 + $0x8] sm:$0xff]
  %v30 = vld [vmem:[%s0 + $0x10] sm:$0xff]
  %v31 = vld [vmem:[%s0 + $0x18] sm:$0xff]
  %v32 = vld [vmem:[%s1] sm:$0xff]
  %v33 = vld [vmem:[%s1 + $0x8] sm:$0xff]
  %v34 = vld [vmem:[%s1 + $0x10] sm:$0xff]
  %v35 = vld [vmem:[%s1 + $0x18] sm:$0xff]
  %v36 = vld [vmem:[%s1 + $0x20] sm:$0xff]
  %v37 = vld [vmem:[%s1 + $0x28] sm:$0xff]
  %v38 = vld [vmem:[%s1 + $0x30] sm:$0xff]
  %v39 = vld [vmem:[%s1 + $0x38] sm:$0xff]
  %v40 = vld [vmem:[%s1 + $0x40] sm:$0xff]
  %v41 = vld [vmem:[%s1 + $0x48] sm:$0xff]
  %v42 = vld [vmem:[%s1 + $0x50] sm:$0xff]
  %v43 = vld [vmem:[%s1 + $0x58] sm:$0xff]
  %v44 = vld [vmem:[%s1 + $0x60] sm:$0xff]
  %v45 = vld [vmem:[%s1 + $0x68] sm:$0xff]
  %v46 = vld [vmem:[%s1 + $0x70] sm:$0xff]
  %v47 = vld [vmem:[%s1 + $0x78] sm:$0xff]
  %v48 = vld [vmem:[%s1 + $0x80] sm:$0xff]
  %v49 = vld [vmem:[%s1 + $0x88] sm:$0xff]
  %v50 = vld [vmem:[%s1 + $0x90] sm:$0xff]
  %v51 = vld [vmem:[%s1 + $0x98] sm:$0xff]
  %v52 = vld [vmem:[%s1 + $0xa0] sm:$0xff]
  %v53 = vld [vmem:[%s1 + $0xa8] sm:$0xff]
  %v54 = vld [vmem:[%s1 + $0xb0] sm:$0xff]
  %v55 = vld [vmem:[%s1 + $0xb8] sm:$0xff]
  %v56 = vld [vmem:[%s1 + $0xc0] sm:$0xff]
  %v57 = vld [vmem:[%s1 + $0xc8] sm:$0xff]
  %v58 = vld [vmem:[%s1 + $0xd0] sm:$0xff]
  %v59 = vld [vmem:[%s1 + $0xd8] sm:$0xff]
  %v60 = vld [vmem:[%s1 + $0xe0] sm:$0xff]
  %v61 = vld [vmem:[%s1 + $0xe8] sm:$0xff]
  %v62 = vld [vmem:[%s1 + $0xf0] sm:$0xff]
  %v63 = vld [vmem:[%s1 + $0xf8] sm:$0xff]
  %v64 = vld [vmem:[%s1 + $0x100] sm:$0xff]
  %v65 = vld [vmem:[%s1 + $0x108] sm:$0xff]
  %v66 = vld [vmem:[%s1 + $0x110] sm:$0xff]
  %v67 = vld [vmem:[%s1 + $0x118] sm:$0xff]
  %v68 = vld [vmem:[%s1 + $0x120] sm:$0xff]
  %v69 = vld [vmem:[%s1 + $0x128] sm:$0xff]
  %v70 = vld [vmem:[%s1 + $0x130] sm:$0xff]
  %v71 = vld [vmem:[%s1 + $0x138] sm:$0xff]
  %v72 = vld [vmem:[%s1 + $0x140] sm:$0xff]
  %v73 = vld [vmem:[%s1 + $0x148] sm:$0xff]
  %v74 = vld [vmem:[%s1 + $0x150] sm:$0xff]
  %v75 = vld [vmem:[%s1 + $0x158] sm:$0xff]
  %v76 = vld [vmem:[%s1 + $0x160] sm:$0xff]
  %v77 = vld [vmem:[%s1 + $0x168] sm:$0xff]
  %v78 = vld [vmem:[%s1 + $0x170] sm:$0xff]
  %v79 = vld [vmem:[%s1 + $0x178] sm:$0xff]
  %v80 = vld [vmem:[%s1 + $0x180] sm:$0xff]
  %v81 = vld [vmem:[%s1 + $0x188] sm:$0xff]
  %v82 = vld [vmem:[%s1 + $0x190] sm:$0xff]
  %v83 = vld [vmem:[%s1 + $0x198] sm:$0xff]
  %v84 = vld [vmem:[%s1 + $0x1a0] sm:$0xff]
  %v85 = vld [vmem:[%s1 + $0x1a8] sm:$0xff]
  %v86 = vld [vmem:[%s1 + $0x1b0] sm:$0xff]
  %v87 = vld [vmem:[%s1 + $0x1b8] sm:$0xff]
  %v88 = vld [vmem:[%s1 + $0x1c0] sm:$0xff]
  %v89 = vld [vmem:[%s1 + $0x1c8] sm:$0xff]
  %v90 = vld [vmem:[%s1 + $0x1d0] sm:$0xff]
  %v91 = vld [vmem:[%s1 + $0x1d8] sm:$0xff]
  %v92 = vld [vmem:[%s1 + $0x1e0] sm:$0xff]
  %v93 = vld [vmem:[%s1 + $0x1e8] sm:$0xff]
  %v94 = vld [vmem:[%s1 + $0x1f0] sm:$0xff]
  %v95 = vld [vmem:[%s1 + $0x1f8] sm:$0xff]
  %v96 = vld [vmem:[%s2] sm:$0x3]
  %v98 = vperm.slane %v96, 0
  %v99 = vperm.slane %v96, 1
  %102 = vmatpush.msra.mxu0 %v62
  %103 = vmatpush.msra.mxu0 %v60
  %104 = vmatpush.msra.mxu0 %v58
  %105 = vmatpush.msra.mxu0 %v56
  %106 = vmatpush.msra.mxu0 %v54
  %107 = vmatpush.msra.mxu0 %v52
  %108 = vmatpush.msra.mxu0 %v50
  %109 = vmatpush.msra.mxu0 %v48
  %110 = vmatpush.msra.mxu0 %v46
  %111 = vmatpush.msra.mxu0 %v44
  %112 = vmatpush.msra.mxu0 %v42
  %113 = vmatpush.msra.mxu0 %v40
  %114 = vmatpush.msra.mxu0 %v38
  %115 = vmatpush.msra.mxu0 %v36
  %116 = vmatpush.msra.mxu0 %v34
  %117 = vmatpush.msra.mxu0 %v32
  %118 = vmatmul.f32.gmra.mxu0 %v28
  %v119 = vpop.f32.mrf.mxu0
  %v120 = vadd.f32 %v98, %v119
  %121 = vmatmul.f32.gmra.mxu0 %v30
  %v122 = vpop.f32.mrf.mxu0
  %v123 = vadd.f32 %v98, %v122
  %124 = vdwg.mxu0
  %125 = vmatpush.msra.mxu0 %v94
  %126 = vmatpush.msra.mxu0 %v92
  %127 = vmatpush.msra.mxu0 %v90
  %128 = vmatpush.msra.mxu0 %v88
  %129 = vmatpush.msra.mxu0 %v86
  %130 = vmatpush.msra.mxu0 %v84
  %131 = vmatpush.msra.mxu0 %v82
  %132 = vmatpush.msra.mxu0 %v80
  %133 = vmatpush.msra.mxu0 %v78
  %134 = vmatpush.msra.mxu0 %v76
  %135 = vmatpush.msra.mxu0 %v74
  %136 = vmatpush.msra.mxu0 %v72
  %137 = vmatpush.msra.mxu0 %v70
  %138 = vmatpush.msra.mxu0 %v68
  %139 = vmatpush.msra.mxu0 %v66
  %140 = vmatpush.msra.mxu0 %v64
  %141 = vmatmul.f32.gmra.mxu0 %v29
  %v142 = vpop.f32.mrf.mxu0
  %v143 = vadd.f32 %v120, %v142
  %144 = vmatmul.f32.gmra.mxu0 %v31
  %v145 = vpop.f32.mrf.mxu0
  %v146 = vadd.f32 %v123, %v145
  %147 = vdwg.mxu0
  %148 = vmatpush.msra.mxu0 %v63
  %149 = vmatpush.msra.mxu0 %v61
  %150 = vmatpush.msra.mxu0 %v59
  %151 = vmatpush.msra.mxu0 %v57
  %152 = vmatpush.msra.mxu0 %v55
  %153 = vmatpush.msra.mxu0 %v53
  %154 = vmatpush.msra.mxu0 %v51
  %155 = vmatpush.msra.mxu0 %v49
  %156 = vmatpush.msra.mxu0 %v47
  %157 = vmatpush.msra.mxu0 %v45
  %158 = vmatpush.msra.mxu0 %v43
  %159 = vmatpush.msra.mxu0 %v41
  %160 = vmatpush.msra.mxu0 %v39
  %161 = vmatpush.msra.mxu0 %v37
  %162 = vmatpush.msra.mxu0 %v35
  %163 = vmatpush.msra.mxu0 %v33
  %164 = vmatmul.f32.gmra.mxu0 %v28
  %v165 = vpop.f32.mrf.mxu0
  %v166 = vadd.f32 %v99, %v165
  %167 = vmatmul.f32.gmra.mxu0 %v30
  %v168 = vpop.f32.mrf.mxu0
  %v169 = vadd.f32 %v99, %v168
  %170 = vdwg.mxu0
  %171 = vmatpush.msra.mxu0 %v95
  %172 = vmatpush.msra.mxu0 %v93
  %173 = vmatpush.msra.mxu0 %v91
  %174 = vmatpush.msra.mxu0 %v89
  %175 = vmatpush.msra.mxu0 %v87
  %176 = vmatpush.msra.mxu0 %v85
  %177 = vmatpush.msra.mxu0 %v83
  %178 = vmatpush.msra.mxu0 %v81
  %179 = vmatpush.msra.mxu0 %v79
  %180 = vmatpush.msra.mxu0 %v77
  %181 = vmatpush.msra.mxu0 %v75
  %182 = vmatpush.msra.mxu0 %v73
  %183 = vmatpush.msra.mxu0 %v71
  %184 = vmatpush.msra.mxu0 %v69
  %185 = vmatpush.msra.mxu0 %v67
  %186 = vmatpush.msra.mxu0 %v65
  %187 = vmatmul.f32.gmra.mxu0 %v29
  %v188 = vpop.f32.mrf.mxu0
  %v189 = vadd.f32 %v166, %v188
  %190 = vmatmul.f32.gmra.mxu0 %v31
  %v191 = vpop.f32.mrf.mxu0
  %v192 = vadd.f32 %v169, %v191
  %193 = vdwg.mxu0
  %v194 = vmul.f32 %v143, 0.5
  %v195 = vmul.f32 %v189, 0.5
  %v196 = vmul.f32 %v146, 0.5
  %v197 = vmul.f32 %v192, 0.5
  %v198 = vmul.f32 %v143, 0.70710677
  %v199 = vmul.f32 %v189, 0.70710677
  %v200 = vmul.f32 %v146, 0.70710677
  %v201 = vmul.f32 %v192, 0.70710677
  %v202 = vmul.f32 %v198, %v198
  %v203 = vmin.f32 16.0, %v202
  %v204 = vmul.f32 %v203, 2.1237322e-06
  %v205 = vadd.f32 %v204, 0.00028619796
  %v206 = vmul.f32 %v203, %v205
  %v207 = vadd.f32 %v206, 0.0036580483
  %v208 = vmul.f32 %v203, %v207
  %v209 = vadd.f32 %v208, 0.05243302
  %v210 = vmul.f32 %v203, %v209
  %v211 = vadd.f32 %v210, 0.18741608
  %v212 = vmul.f32 %v203, %v211
  %v213 = vadd.f32 %v212, 1.1283791
  %v214 = vmul.f32 %v198, %v213
  %v215 = vmul.f32 %v203, 3.8918573e-05
  %v216 = vadd.f32 %v215, 0.001143296
  %v217 = vmul.f32 %v203, %v216
  %v218 = vadd.f32 %v217, 0.014752088
  %v219 = vmul.f32 %v203, %v218
  %v220 = vadd.f32 %v219, 0.112945676
  %v221 = vmul.f32 %v203, %v220
  %v222 = vadd.f32 %v221, 0.4994258
  %v223 = vmul.f32 %v203, %v222
  %v224 = vadd.f32 %v223, 1.0
  %v225 = vrcp.pop %v224
  %v226 = vmul.f32 %v224, %v225
  %v227 = vsub.f32 1.0, %v226
  %v228 = vmul.f32 %v225, %v227
  %v229 = vadd.f32 %v225, %v228
  %vm230 = vweird.f32 %v224
  %vm231 = vweird.f32 %v225
  %vm232 = vmor %vm230, %vm231
  %v233 = vsel %vm232, %v225, %v229
  %v234 = vand.u32 2147483647, %v224
  %vm235 = vcmp.eq.f32.partialorder %v234, 8.507059e+37
  %v236 = vand.u32 %v224, 2147483648
  %v237 = vor.u32 1.1754944e-38, %v236
  %v238 = vsel %vm235, %v237, %v233
  %v239 = vmul.f32 %v214, %v238
  %v240 = vmin.f32 %v239, 1.0
  %v241 = vmax.f32 %v240, -1.0
  %v242 = vmul.f32 %v199, %v199
  %v243 = vmin.f32 16.0, %v242
  %v244 = vmul.f32 %v243, 2.1237322e-06
  %v245 = vadd.f32 %v244, 0.00028619796
  %v246 = vmul.f32 %v243, %v245
  %v247 = vadd.f32 %v246, 0.0036580483
  %v248 = vmul.f32 %v243, %v247
  %v249 = vadd.f32 %v248, 0.05243302
  %v250 = vmul.f32 %v243, %v249
  %v251 = vadd.f32 %v250, 0.18741608
  %v252 = vmul.f32 %v243, %v251
  %v253 = vadd.f32 %v252, 1.1283791
  %v254 = vmul.f32 %v199, %v253
  %v255 = vmul.f32 %v243, 3.8918573e-05
  %v256 = vadd.f32 %v255, 0.001143296
  %v257 = vmul.f32 %v243, %v256
  %v258 = vadd.f32 %v257, 0.014752088
  %v259 = vmul.f32 %v243, %v258
  %v260 = vadd.f32 %v259, 0.112945676
  %v261 = vmul.f32 %v243, %v260
  %v262 = vadd.f32 %v261, 0.4994258
  %v263 = vmul.f32 %v243, %v262
  %v264 = vadd.f32 %v263, 1.0
  %v265 = vrcp.pop %v264
  %v266 = vmul.f32 %v264, %v265
  %v267 = vsub.f32 1.0, %v266
  %v268 = vmul.f32 %v265, %v267
  %v269 = vadd.f32 %v265, %v268
  %vm270 = vweird.f32 %v264
  %vm271 = vweird.f32 %v265
  %vm272 = vmor %vm270, %vm271
  %v273 = vsel %vm272, %v265, %v269
  %v274 = vand.u32 2147483647, %v264
  %vm275 = vcmp.eq.f32.partialorder %v274, 8.507059e+37
  %v276 = vand.u32 %v264, 2147483648
  %v277 = vor.u32 1.1754944e-38, %v276
  %v278 = vsel %vm275, %v277, %v273
  %v279 = vmul.f32 %v254, %v278
  %v280 = vmin.f32 %v279, 1.0
  %v281 = vmax.f32 %v280, -1.0
  %v282 = vmul.f32 %v200, %v200
  %v283 = vmin.f32 16.0, %v282
  %v284 = vmul.f32 %v283, 2.1237322e-06
  %v285 = vadd.f32 %v284, 0.00028619796
  %v286 = vmul.f32 %v283, %v285
  %v287 = vadd.f32 %v286, 0.0036580483
  %v288 = vmul.f32 %v283, %v287
  %v289 = vadd.f32 %v288, 0.05243302
  %v290 = vmul.f32 %v283, %v289
  %v291 = vadd.f32 %v290, 0.18741608
  %v292 = vmul.f32 %v283, %v291
  %v293 = vadd.f32 %v292, 1.1283791
  %v294 = vmul.f32 %v200, %v293
  %v295 = vmul.f32 %v283, 3.8918573e-05
  %v296 = vadd.f32 %v295, 0.001143296
  %v297 = vmul.f32 %v283, %v296
  %v298 = vadd.f32 %v297, 0.014752088
  %v299 = vmul.f32 %v283, %v298
  %v300 = vadd.f32 %v299, 0.112945676
  %v301 = vmul.f32 %v283, %v300
  %v302 = vadd.f32 %v301, 0.4994258
  %v303 = vmul.f32 %v283, %v302
  %v304 = vadd.f32 %v303, 1.0
  %v305 = vrcp.pop %v304
  %v306 = vmul.f32 %v304, %v305
  %v307 = vsub.f32 1.0, %v306
  %v308 = vmul.f32 %v305, %v307
  %v309 = vadd.f32 %v305, %v308
  %vm310 = vweird.f32 %v304
  %vm311 = vweird.f32 %v305
  %vm312 = vmor %vm310, %vm311
  %v313 = vsel %vm312, %v305, %v309
  %v314 = vand.u32 2147483647, %v304
  %vm315 = vcmp.eq.f32.partialorder %v314, 8.507059e+37
  %v316 = vand.u32 %v304, 2147483648
  %v317 = vor.u32 1.1754944e-38, %v316
  %v318 = vsel %vm315, %v317, %v313
  %v319 = vmul.f32 %v294, %v318
  %v320 = vmin.f32 %v319, 1.0
  %v321 = vmax.f32 %v320, -1.0
  %v322 = vmul.f32 %v201, %v201
  %v323 = vmin.f32 16.0, %v322
  %v324 = vmul.f32 %v323, 2.1237322e-06
  %v325 = vadd.f32 %v324, 0.00028619796
  %v326 = vmul.f32 %v323, %v325
  %v327 = vadd.f32 %v326, 0.0036580483
  %v328 = vmul.f32 %v323, %v327
  %v329 = vadd.f32 %v328, 0.05243302
  %v330 = vmul.f32 %v323, %v329
  %v331 = vadd.f32 %v330, 0.18741608
  %v332 = vmul.f32 %v323, %v331
  %v333 = vadd.f32 %v332, 1.1283791
  %v334 = vmul.f32 %v201, %v333
  %v335 = vmul.f32 %v323, 3.8918573e-05
  %v336 = vadd.f32 %v335, 0.001143296
  %v337 = vmul.f32 %v323, %v336
  %v338 = vadd.f32 %v337, 0.014752088
  %v339 = vmul.f32 %v323, %v338
  %v340 = vadd.f32 %v339, 0.112945676
  %v341 = vmul.f32 %v323, %v340
  %v342 = vadd.f32 %v341, 0.4994258
  %v343 = vmul.f32 %v323, %v342
  %v344 = vadd.f32 %v343, 1.0
  %v345 = vrcp.pop %v344
  %v346 = vmul.f32 %v344, %v345
  %v347 = vsub.f32 1.0, %v346
  %v348 = vmul.f32 %v345, %v347
  %v349 = vadd.f32 %v345, %v348
  %vm350 = vweird.f32 %v344
  %vm351 = vweird.f32 %v345
  %vm352 = vmor %vm350, %vm351
  %v353 = vsel %vm352, %v345, %v349
  %v354 = vand.u32 2147483647, %v344
  %vm355 = vcmp.eq.f32.partialorder %v354, 8.507059e+37
  %v356 = vand.u32 %v344, 2147483648
  %v357 = vor.u32 1.1754944e-38, %v356
  %v358 = vsel %vm355, %v357, %v353
  %v359 = vmul.f32 %v334, %v358
  %v360 = vmin.f32 %v359, 1.0
  %v361 = vmax.f32 %v360, -1.0
  %v362 = vadd.f32 %v241, 1.0
  %v363 = vadd.f32 %v281, 1.0
  %v364 = vadd.f32 %v321, 1.0
  %v365 = vadd.f32 %v361, 1.0
  %v366 = vmul.f32 %v194, %v362
  %v367 = vmul.f32 %v195, %v363
  %v368 = vmul.f32 %v196, %v364
  %v369 = vmul.f32 %v197, %v365
  %v370 = vld [vmem:[#allocation2] sm:$0xff]
  %v371 = vld [vmem:[#allocation2 + $0x8] sm:$0xff]
  %v372 = vld [vmem:[#allocation2 + $0x10] sm:$0xff]
  %v373 = vld [vmem:[#allocation2 + $0x18] sm:$0xff]
  %v374 = vld [vmem:[%s3] sm:$0xff]
  %v375 = vld [vmem:[%s3 + $0x8] sm:$0xff]
  %v376 = vld [vmem:[%s3 + $0x10] sm:$0xff]
  %v377 = vld [vmem:[%s3 + $0x18] sm:$0xff]
  %v378 = vld [vmem:[%s3 + $0x20] sm:$0xff]
  %v379 = vld [vmem:[%s3 + $0x28] sm:$0xff]
  %v380 = vld [vmem:[%s3 + $0x30] sm:$0xff]
  %v381 = vld [vmem:[%s3 + $0x38] sm:$0xff]
  %v382 = vld [vmem:[%s3 + $0x40] sm:$0xff]
  %v383 = vld [vmem:[%s3 + $0x48] sm:$0xff]
  %v384 = vld [vmem:[%s3 + $0x50] sm:$0xff]
  %v385 = vld [vmem:[%s3 + $0x58] sm:$0xff]
  %v386 = vld [vmem:[%s3 + $0x60] sm:$0xff]
  %v387 = vld [vmem:[%s3 + $0x68] sm:$0xff]
  %v388 = vld [vmem:[%s3 + $0x70] sm:$0xff]
  %v389 = vld [vmem:[%s3 + $0x78] sm:$0xff]
  %v390 = vld [vmem:[%s3 + $0x80] sm:$0xff]
  %v391 = vld [vmem:[%s3 + $0x88] sm:$0xff]
  %v392 = vld [vmem:[%s3 + $0x90] sm:$0xff]
  %v393 = vld [vmem:[%s3 + $0x98] sm:$0xff]
  %v394 = vld [vmem:[%s3 + $0xa0] sm:$0xff]
  %v395 = vld [vmem:[%s3 + $0xa8] sm:$0xff]
  %v396 = vld [vmem:[%s3 + $0xb0] sm:$0xff]
  %v397 = vld [vmem:[%s3 + $0xb8] sm:$0xff]
  %v398 = vld [vmem:[%s3 + $0xc0] sm:$0xff]
  %v399 = vld [vmem:[%s3 + $0xc8] sm:$0xff]
  %v400 = vld [vmem:[%s3 + $0xd0] sm:$0xff]
  %v401 = vld [vmem:[%s3 + $0xd8] sm:$0xff]
  %v402 = vld [vmem:[%s3 + $0xe0] sm:$0xff]
  %v403 = vld [vmem:[%s3 + $0xe8] sm:$0xff]
  %v404 = vld [vmem:[%s3 + $0xf0] sm:$0xff]
  %v405 = vld [vmem:[%s3 + $0xf8] sm:$0xff]
  %v406 = vld [vmem:[%s3 + $0x100] sm:$0xff]
  %v407 = vld [vmem:[%s3 + $0x108] sm:$0xff]
  %v408 = vld [vmem:[%s3 + $0x110] sm:$0xff]
  %v409 = vld [vmem:[%s3 + $0x118] sm:$0xff]
  %v410 = vld [vmem:[%s3 + $0x120] sm:$0xff]
  %v411 = vld [vmem:[%s3 + $0x128] sm:$0xff]
  %v412 = vld [vmem:[%s3 + $0x130] sm:$0xff]
  %v413 = vld [vmem:[%s3 + $0x138] sm:$0xff]
  %v414 = vld [vmem:[%s3 + $0x140] sm:$0xff]
  %v415 = vld [vmem:[%s3 + $0x148] sm:$0xff]
  %v416 = vld [vmem:[%s3 + $0x150] sm:$0xff]
  %v417 = vld [vmem:[%s3 + $0x158] sm:$0xff]
  %v418 = vld [vmem:[%s3 + $0x160] sm:$0xff]
  %v419 = vld [vmem:[%s3 + $0x168] sm:$0xff]
  %v420 = vld [vmem:[%s3 + $0x170] sm:$0xff]
  %v421 = vld [vmem:[%s3 + $0x178] sm:$0xff]
  %v422 = vld [vmem:[%s3 + $0x180] sm:$0xff]
  %v423 = vld [vmem:[%s3 + $0x188] sm:$0xff]
  %v424 = vld [vmem:[%s3 + $0x190] sm:$0xff]
  %v425 = vld [vmem:[%s3 + $0x198] sm:$0xff]
  %v426 = vld [vmem:[%s3 + $0x1a0] sm:$0xff]
  %v427 = vld [vmem:[%s3 + $0x1a8] sm:$0xff]
  %v428 = vld [vmem:[%s3 + $0x1b0] sm:$0xff]
  %v429 = vld [vmem:[%s3 + $0x1b8] sm:$0xff]
  %v430 = vld [vmem:[%s3 + $0x1c0] sm:$0xff]
  %v431 = vld [vmem:[%s3 + $0x1c8] sm:$0xff]
  %v432 = vld [vmem:[%s3 + $0x1d0] sm:$0xff]
  %v433 = vld [vmem:[%s3 + $0x1d8] sm:$0xff]
  %v434 = vld [vmem:[%s3 + $0x1e0] sm:$0xff]
  %v435 = vld [vmem:[%s3 + $0x1e8] sm:$0xff]
  %v436 = vld [vmem:[%s3 + $0x1f0] sm:$0xff]
  %v437 = vld [vmem:[%s3 + $0x1f8] sm:$0xff]
  %438 = vmatpush.msra.mxu0 %v404
  %439 = vmatpush.msra.mxu0 %v402
  %440 = vmatpush.msra.mxu0 %v400
  %441 = vmatpush.msra.mxu0 %v398
  %442 = vmatpush.msra.mxu0 %v396
  %443 = vmatpush.msra.mxu0 %v394
  %444 = vmatpush.msra.mxu0 %v392
  %445 = vmatpush.msra.mxu0 %v390
  %446 = vmatpush.msra.mxu0 %v388
  %447 = vmatpush.msra.mxu0 %v386
  %448 = vmatpush.msra.mxu0 %v384
  %449 = vmatpush.msra.mxu0 %v382
  %450 = vmatpush.msra.mxu0 %v380
  %451 = vmatpush.msra.mxu0 %v378
  %452 = vmatpush.msra.mxu0 %v376
  %453 = vmatpush.msra.mxu0 %v374
  %454 = vmatmul.f32.gmra.mxu0 %v366
  %v455 = vpop.f32.mrf.mxu0
  %v456 = vadd.f32 0.0, %v455
  %457 = vmatmul.f32.gmra.mxu0 %v368
  %v458 = vpop.f32.mrf.mxu0
  %v459 = vadd.f32 0.0, %v458
  %460 = vdwg.mxu0
  %461 = vmatpush.msra.mxu0 %v436
  %462 = vmatpush.msra.mxu0 %v434
  %463 = vmatpush.msra.mxu0 %v432
  %464 = vmatpush.msra.mxu0 %v430
  %465 = vmatpush.msra.mxu0 %v428
  %466 = vmatpush.msra.mxu0 %v426
  %467 = vmatpush.msra.mxu0 %v424
  %468 = vmatpush.msra.mxu0 %v422
  %469 = vmatpush.msra.mxu0 %v420
  %470 = vmatpush.msra.mxu0 %v418
  %471 = vmatpush.msra.mxu0 %v416
  %472 = vmatpush.msra.mxu0 %v414
  %473 = vmatpush.msra.mxu0 %v412
  %474 = vmatpush.msra.mxu0 %v410
  %475 = vmatpush.msra.mxu0 %v408
  %476 = vmatpush.msra.mxu0 %v406
  %477 = vmatmul.f32.gmra.mxu0 %v367
  %v478 = vpop.f32.mrf.mxu0
  %v479 = vadd.f32 %v456, %v478
  %480 = vmatmul.f32.gmra.mxu0 %v369
  %v481 = vpop.f32.mrf.mxu0
  %v482 = vadd.f32 %v459, %v481
  %483 = vdwg.mxu0
  %484 = vmatpush.msra.mxu0 %v405
  %485 = vmatpush.msra.mxu0 %v403
  %486 = vmatpush.msra.mxu0 %v401
  %487 = vmatpush.msra.mxu0 %v399
  %488 = vmatpush.msra.mxu0 %v397
  %489 = vmatpush.msra.mxu0 %v395
  %490 = vmatpush.msra.mxu0 %v393
  %491 = vmatpush.msra.mxu0 %v391
  %492 = vmatpush.msra.mxu0 %v389
  %493 = vmatpush.msra.mxu0 %v387
  %494 = vmatpush.msra.mxu0 %v385
  %495 = vmatpush.msra.mxu0 %v383
  %496 = vmatpush.msra.mxu0 %v381
  %497 = vmatpush.msra.mxu0 %v379
  %498 = vmatpush.msra.mxu0 %v377
  %499 = vmatpush.msra.mxu0 %v375
  %500 = vmatmul.f32.gmra.mxu0 %v366
  %v501 = vpop.f32.mrf.mxu0
  %v502 = vadd.f32 0.0, %v501
  %503 = vmatmul.f32.gmra.mxu0 %v368
  %v504 = vpop.f32.mrf.mxu0
  %v505 = vadd.f32 0.0, %v504
  %506 = vdwg.mxu0
  %507 = vmatpush.msra.mxu0 %v437
  %508 = vmatpush.msra.mxu0 %v435
  %509 = vmatpush.msra.mxu0 %v433
  %510 = vmatpush.msra.mxu0 %v431
  %511 = vmatpush.msra.mxu0 %v429
  %512 = vmatpush.msra.mxu0 %v427
  %513 = vmatpush.msra.mxu0 %v425
  %514 = vmatpush.msra.mxu0 %v423
  %515 = vmatpush.msra.mxu0 %v421
  %516 = vmatpush.msra.mxu0 %v419
  %517 = vmatpush.msra.mxu0 %v417
  %518 = vmatpush.msra.mxu0 %v415
  %519 = vmatpush.msra.mxu0 %v413
  %520 = vmatpush.msra.mxu0 %v411
  %521 = vmatpush.msra.mxu0 %v409
  %522 = vmatpush.msra.mxu0 %v407
  %523 = vmatmul.f32.gmra.mxu0 %v367
  %v524 = vpop.f32.mrf.mxu0
  %v525 = vadd.f32 %v502, %v524
  %526 = vmatmul.f32.gmra.mxu0 %v369
  %v527 = vpop.f32.mrf.mxu0
  %v528 = vadd.f32 %v505, %v527
  %529 = vdwg.mxu0
  %v530 = vadd.f32 %v370, %v479
  %v531 = vadd.f32 %v371, %v525
  %v532 = vadd.f32 %v372, %v482
  %v533 = vadd.f32 %v373, %v528
  %534 = vst [vmem:[#allocation2] sm:$0xff] %v530
  %535 = vst [vmem:[#allocation2 + $0x8] sm:$0xff] %v531
  %536 = vst [vmem:[#allocation2 + $0x10] sm:$0xff] %v532
  %537 = vst [vmem:[#allocation2 + $0x18] sm:$0xff] %v533
  // Predicated region
  $region26: #{_ffn_pallas.1} parent=0 // pred_check
    %p538 = pneg %p20
  $region27: #{_ffn_pallas.1} parent=0 // pred_check_branch
    %540 = sbr.rel (%p538) target = $region29
  $region28: #{_ffn_pallas.1} parent=0 // pred_region
    %v541 = vld [vmem:[#allocation2] sm:$0xff]
    %v542 = vld [vmem:[#allocation2 + $0x8] sm:$0xff]
    %v543 = vld [vmem:[#allocation2 + $0x10] sm:$0xff]
    %v544 = vld [vmem:[#allocation2 + $0x18] sm:$0xff]
    %v545 = vld [vmem:[%s4] sm:$0x3]
    %v547 = vperm.slane %v545, 0
    %v548 = vperm.slane %v545, 1
    %v551 = vadd.f32 %v541, %v547
    %v552 = vadd.f32 %v542, %v548
    %v553 = vadd.f32 %v543, %v547
    %v554 = vadd.f32 %v544, %v548
    %555 = vst [vmem:[%s5] sm:$0xff] %v551
    %556 = vst [vmem:[%s5 + $0x8] sm:$0xff] %v552
    %557 = vst [vmem:[%s5 + $0x10] sm:$0xff] %v553
    %558 = vst [vmem:[%s5 + $0x18] sm:$0xff] %v554
  $region29: #{_ffn_pallas.1} parent=0 // pred_fallthru
    _
  // Predicated region
  $region30: #{_ffn_pallas.1} parent=0 // pred_check
    _
  $region31: #{_ffn_pallas.1} parent=0 // pred_check_branch
    %560 = sbr.rel (0) target = $region33
  $region32: #{_ffn_pallas.1} parent=0 // pred_region
    _
  $region33: #{_ffn_pallas.1} parent=0 // pred_fallthru
    _
  // Predicated region
  $region34: #{_ffn_pallas.1} parent=0 // pred_check
    _
  $region35: #{_ffn_pallas.1} parent=0 // pred_check_branch
    %562 = sbr.rel (0) target = $region37
  $region36: #{_ffn_pallas.1} parent=0 // pred_region
    _
  $region37: #{_ffn_pallas.1} parent=0 // pred_fallthru
    _

</llo_original>
